<compile_context>
chip_gen: v7x
topology: tpu7x:2x2x1
jax: 0.10.0
libtpu: 0.0.40
codegen_flags: <defaults>
</compile_context>

<pallas_src>
import functools

import jax
import jax.numpy as jnp
from jax.experimental import pallas as pl
from jax.experimental.pallas import tpu as pltpu


def _dscnn_kernel(x_ref, cw_ref, cb_ref, w_ref, o_ref, *, keff):
    # x_ref: (C, L) block; channels on sublanes, flattened batch*time on
    # lanes (each batch element owns a 128-aligned, W-wide lane segment).
    a = jax.nn.sigmoid(x_ref[...])               # (C, L) f32, exp/recip on EUP
    length = a.shape[1]

    # Depthwise conv with BatchNorm and AvgPool1d(2, stride=1) folded into
    # the taps (K+1 of them).  Shifts are lane rotations on the XLU; the
    # wrapped-around columns only affect stripped output positions.
    cw = cw_ref[...]                             # (C, Keff)
    acc = cw[:, 0:1] * a
    for k in range(1, keff):                     # static; Keff = K + 1, small
        shifted = pltpu.roll(a, shift=length - k, axis=1)   # == left-shift by k
        acc = acc + cw[:, k:k + 1] * shifted
    acc = acc + cb_ref[...]                      # (C, 1) BN-folded bias

    # Channel mix H(G(.)) folded to W_eff (out_c, C): one MXU matmul with the
    # C=8 contraction on sublanes and batch*time on the lanes.
    o_ref[...] = jnp.dot(w_ref[...], acc,
                         preferred_element_type=jnp.float32).astype(o_ref.dtype)


def dscnn_block_lr(x, g_w, h_w, conv_w, conv_b, bn_mean, bn_var,
                   *, kernel, eps=1e-5, block_n=None):
    """x: (N, C, T) float32.  Returns (N, out_c, T - kernel)."""
    N, C, T = x.shape
    out_c = h_w.shape[0]
    keff = kernel + 1            # conv taps after folding AvgPool1d(2, stride=1)
    Tp = T - kernel              # output length (valid conv, then 2-tap pool)
    assert Tp >= 1

    # ---- host-side algebraic folding -------------------------------------
    # Low-rank pair H(G(.)) -> single (out_c, C) matrix.
    w_eff = jnp.asarray(h_w, jnp.float32) @ jnp.asarray(g_w, jnp.float32)
    # BatchNorm (eval, affine=False) folded into the depthwise conv.
    inv_std = jax.lax.rsqrt(jnp.asarray(bn_var, jnp.float32) + eps)       # (C,)
    cw_raw = jnp.asarray(conv_w, jnp.float32).reshape(C, kernel)
    cw_f = cw_raw * inv_std[:, None]                                      # (C, K)
    cb_f = (jnp.asarray(conv_b, jnp.float32)
            - jnp.asarray(bn_mean, jnp.float32) * inv_std * cw_raw.sum(axis=1))
    # AvgPool1d(kernel=2, stride=1) folded into the taps: (C, K) -> (C, K+1);
    # the bias is unchanged (0.5*(b+b) = b).
    cw_z = jnp.pad(cw_f, ((0, 0), (1, 1)))                                # (C, K+2)
    cwp = 0.5 * (cw_z[:, 1:] + cw_z[:, :-1])                              # (C, K+1)
    cb = cb_f.reshape(C, 1)

    # ---- lane-dense, channel-major layout --------------------------------
    # Each batch element gets a W-wide lane segment (W = T rounded up to 128).
    # Valid outputs t < Tp only read input columns < T, so zero padding and
    # roll wraparound across element boundaries only touch output columns
    # >= Tp, which are stripped below.
    W = ((T + 127) // 128) * 128

    # Batch blocking: biggest block that keeps in/out buffers + in-kernel
    # temporaries comfortably inside the scoped-VMEM default; no forced
    # multi-step grid for tiny N (single-TC v5e/v6e).
    if block_n is None:
        per_elem = (C + out_c) * W * 4                       # bytes, f32
        block_n = max(1, min(N, (6 * 1024 * 1024) // per_elem))
    grid_n = pl.cdiv(N, block_n)
    N_pad = grid_n * block_n
    L = block_n * W

    xt = jnp.transpose(jnp.asarray(x, jnp.float32), (1, 0, 2))            # (C, N, T)
    xt = jnp.pad(xt, ((0, 0), (0, N_pad - N), (0, W - T)))                # (C, N_pad, W)
    x_flat = xt.reshape(C, N_pad * W)

    out_flat = pl.pallas_call(
        functools.partial(_dscnn_kernel, keff=keff),
        out_shape=jax.ShapeDtypeStruct((out_c, N_pad * W), jnp.float32),
        grid_spec=pltpu.PrefetchScalarGridSpec(
            num_scalar_prefetch=0,
            grid=(grid_n,),
            in_specs=[
                pl.BlockSpec((C, L), lambda n: (0, n)),
                pl.BlockSpec((C, keff), lambda n: (0, 0)),
                pl.BlockSpec((C, 1), lambda n: (0, 0)),
                pl.BlockSpec((out_c, C), lambda n: (0, 0)),
            ],
            out_specs=pl.BlockSpec((out_c, L), lambda n: (0, n)),
        ),
        compiler_params=pltpu.CompilerParams(
            dimension_semantics=("parallel",)),
    )(x_flat, cwp, cb, w_eff)

    # Strip batch/time padding and restore (N, out_c, Tp) -- layout plumbing.
    out = out_flat.reshape(out_c, N_pad, W)[:, :N, :Tp]
    return jnp.transpose(out, (1, 0, 2))


def _reference(x, g_w, h_w, conv_w, conv_b, bn_mean, bn_var, *, kernel, eps=1e-5):
    # Pure-JAX mirror of the PyTorch eval-mode forward (unfused math).
    a = jax.nn.sigmoid(x)
    a = (a - bn_mean[None, :, None]) / jnp.sqrt(bn_var[None, :, None] + eps)
    Tc = x.shape[-1] - kernel + 1
    cw = conv_w.reshape(x.shape[1], kernel)
    conv = sum(cw[None, :, k:k + 1] * a[:, :, k:k + Tc] for k in range(kernel))
    conv = conv + conv_b[None, :, None]
    y = jnp.transpose(conv, (0, 2, 1))
    z = y @ g_w.T @ h_w.T
    o = jnp.transpose(z, (0, 2, 1))
    return 0.5 * (o[:, :, :-1] + o[:, :, 1:])   # AvgPool1d(kernel=2, stride=1)


if __name__ == "__main__":
    # Module config: in_channels=8, out_channels=16, kernel=3,
    # activation='sigmoid', batch_norm=0.1, avg_pool=2 (stride=1 in the
    # module), dropout=0.1 (identity at eval), groups=1, shuffle=0.
    N, C, T = 8, 8, 32
    OUT_C, RANK, K = 16, 50, 3

    key = jax.random.PRNGKey(0)
    k_x, k_g, k_h, k_cw, k_cb, k_bm, k_bv = jax.random.split(key, 7)

    x = jax.random.normal(k_x, (N, C, T), jnp.float32)
    g_w = jax.random.normal(k_g, (RANK, C), jnp.float32) * 0.2      # Linear(C, 50).weight
    h_w = jax.random.normal(k_h, (OUT_C, RANK), jnp.float32) * 0.2  # Linear(50, OUT_C).weight
    conv_w = jax.random.normal(k_cw, (C, 1, K), jnp.float32) * 0.3  # depthwise Conv1d weight
    conv_b = jax.random.normal(k_cb, (C,), jnp.float32) * 0.1       # depthwise Conv1d bias
    bn_mean = jax.random.normal(k_bm, (C,), jnp.float32) * 0.1      # running_mean
    bn_var = jax.random.uniform(k_bv, (C,), jnp.float32, 0.5, 1.5)  # running_var

    out = dscnn_block_lr(x, g_w, h_w, conv_w, conv_b, bn_mean, bn_var, kernel=K)
    out = jax.block_until_ready(out)

    ref = _reference(x, g_w, h_w, conv_w, conv_b, bn_mean, bn_var, kernel=K)
    assert out.shape == (N, OUT_C, T - K), out.shape
    assert jnp.allclose(out, ref, atol=1e-4, rtol=1e-4), "mismatch vs JAX reference"

    print("KERNEL_OK")
</pallas_src>

<mosaic_0001>
module attributes {stable_mosaic.version = 11 : i64} {
  func.func @_dscnn_kernel(%arg0: i32, %arg1: memref<8x1024xf32, #tpu.memory_space<vmem>>, %arg2: memref<8x4xf32, #tpu.memory_space<vmem>>, %arg3: memref<8x1xf32, #tpu.memory_space<vmem>>, %arg4: memref<16x8xf32, #tpu.memory_space<vmem>>, %arg5: memref<16x1024xf32, #tpu.memory_space<vmem>>) attributes {dimension_semantics = [#tpu.dimension_semantics<parallel>], iteration_bounds = array<i64: 1>, scalar_prefetch = 0 : i64, scratch_operands = 0 : i64, tpu.core_type = #tpu.core_type<tc>, window_params = [{transform_indices = @transform_0, window_bounds = array<i64: 8, 1024>}, {pipeline_mode = #tpu.pipeline_mode<synchronous>, transform_indices = @transform_1, window_bounds = array<i64: 8, 4>}, {pipeline_mode = #tpu.pipeline_mode<synchronous>, transform_indices = @transform_2, window_bounds = array<i64: 8, 1>}, {pipeline_mode = #tpu.pipeline_mode<synchronous>, transform_indices = @transform_3, window_bounds = array<i64: 16, 8>}, {transform_indices = @transform_4, window_bounds = array<i64: 16, 1024>}]} {
    %c0 = arith.constant 0 : index
    %c0_0 = arith.constant 0 : index
    %0 = vector.load %arg1[%c0, %c0_0] : memref<8x1024xf32, #tpu.memory_space<vmem>>, vector<8x1024xf32>
    %1 = arith.negf %0 : vector<8x1024xf32>
    %2 = math.exp %1 : vector<8x1024xf32>
    %cst = arith.constant 1.000000e+00 : f32
    %3 = vector.broadcast %cst : f32 to vector<8x1024xf32>
    %4 = arith.addf %3, %2 : vector<8x1024xf32>
    %5 = arith.divf %3, %4 : vector<8x1024xf32>
    %c0_1 = arith.constant 0 : index
    %c0_2 = arith.constant 0 : index
    %6 = vector.load %arg2[%c0_1, %c0_2] : memref<8x4xf32, #tpu.memory_space<vmem>>, vector<8x4xf32>
    %7 = vector.extract_strided_slice %6 {offsets = [0, 0], sizes = [8, 1], strides = [1, 1]} : vector<8x4xf32> to vector<8x1xf32>
    %8 = vector.broadcast %7 : vector<8x1xf32> to vector<8x1024xf32>
    %9 = arith.mulf %8, %5 : vector<8x1024xf32>
    %c1023_i32 = arith.constant 1023 : i32
    %10 = tpu.dynamic_rotate %5 by %c1023_i32 dim 1 : vector<8x1024xf32>, i32 -> vector<8x1024xf32>
    %11 = vector.extract_strided_slice %6 {offsets = [0, 1], sizes = [8, 1], strides = [1, 1]} : vector<8x4xf32> to vector<8x1xf32>
    %12 = vector.broadcast %11 : vector<8x1xf32> to vector<8x1024xf32>
    %13 = arith.mulf %12, %10 : vector<8x1024xf32>
    %14 = arith.addf %9, %13 : vector<8x1024xf32>
    %c1022_i32 = arith.constant 1022 : i32
    %15 = tpu.dynamic_rotate %5 by %c1022_i32 dim 1 : vector<8x1024xf32>, i32 -> vector<8x1024xf32>
    %16 = vector.extract_strided_slice %6 {offsets = [0, 2], sizes = [8, 1], strides = [1, 1]} : vector<8x4xf32> to vector<8x1xf32>
    %17 = vector.broadcast %16 : vector<8x1xf32> to vector<8x1024xf32>
    %18 = arith.mulf %17, %15 : vector<8x1024xf32>
    %19 = arith.addf %14, %18 : vector<8x1024xf32>
    %c1021_i32 = arith.constant 1021 : i32
    %20 = tpu.dynamic_rotate %5 by %c1021_i32 dim 1 : vector<8x1024xf32>, i32 -> vector<8x1024xf32>
    %21 = vector.extract_strided_slice %6 {offsets = [0, 3], sizes = [8, 1], strides = [1, 1]} : vector<8x4xf32> to vector<8x1xf32>
    %22 = vector.broadcast %21 : vector<8x1xf32> to vector<8x1024xf32>
    %23 = arith.mulf %22, %20 : vector<8x1024xf32>
    %24 = arith.addf %19, %23 : vector<8x1024xf32>
    %c0_3 = arith.constant 0 : index
    %c0_4 = arith.constant 0 : index
    %25 = vector.load %arg3[%c0_3, %c0_4] : memref<8x1xf32, #tpu.memory_space<vmem>>, vector<8x1xf32>
    %26 = vector.broadcast %25 : vector<8x1xf32> to vector<8x1024xf32>
    %27 = arith.addf %24, %26 : vector<8x1024xf32>
    %c0_5 = arith.constant 0 : index
    %c0_6 = arith.constant 0 : index
    %28 = vector.load %arg4[%c0_5, %c0_6] : memref<16x8xf32, #tpu.memory_space<vmem>>, vector<16x8xf32>
    %cst_7 = arith.constant dense<0.000000e+00> : vector<16x1024xf32>
    %29 = tpu.matmul %28, %27, %cst_7 {dimension_numbers = #tpu.dot_dimension_numbers<[1], [0], [0], [1], [0, 0, 1, 1], [], []>} : vector<16x8xf32>, vector<8x1024xf32>, vector<16x1024xf32> -> vector<16x1024xf32>
    %c0_8 = arith.constant 0 : index
    %c0_9 = arith.constant 0 : index
    %30 = vector.load %arg5[%c0_8, %c0_9] : memref<16x1024xf32, #tpu.memory_space<vmem>>, vector<16x1024xf32>
    tpu.vector_store %arg5[%c0_8, %c0_9], %29 {strides = array<i32>} : memref<16x1024xf32, #tpu.memory_space<vmem>>, vector<16x1024xf32>,
    return
  }
  func.func @transform_0(%arg0: i32) -> (i32, i32) {
    %c0_i32 = arith.constant 0 : i32
    %c0_i32_0 = arith.constant 0 : i32
    return %c0_i32, %arg0 : i32, i32
  }
  func.func @transform_1(%arg0: i32) -> (i32, i32) {
    %c0_i32 = arith.constant 0 : i32
    %c0_i32_0 = arith.constant 0 : i32
    %c0_i32_1 = arith.constant 0 : i32
    return %c0_i32, %c0_i32_0 : i32, i32
  }
  func.func @transform_2(%arg0: i32) -> (i32, i32) {
    %c0_i32 = arith.constant 0 : i32
    %c0_i32_0 = arith.constant 0 : i32
    %c0_i32_1 = arith.constant 0 : i32
    return %c0_i32, %c0_i32_0 : i32, i32
  }
  func.func @transform_3(%arg0: i32) -> (i32, i32) {
    %c0_i32 = arith.constant 0 : i32
    %c0_i32_0 = arith.constant 0 : i32
    %c0_i32_1 = arith.constant 0 : i32
    return %c0_i32, %c0_i32_0 : i32, i32
  }
  func.func @transform_4(%arg0: i32) -> (i32, i32) {
    %c0_i32 = arith.constant 0 : i32
    %c0_i32_0 = arith.constant 0 : i32
    return %c0_i32, %arg0 : i32, i32
  }
}

</mosaic_0001>

<llo_original>
// kernel: tpu_custom_call.1
$region0: #{tpu_custom_call.1}
  #allocation0 [shape = 'u32[]', space=smem, size = 0x4, offset = 0x4, fixed_abs, tag = 'smem constant byte address 0x4 - core index']
  #allocation1 [shape = 'u32[144,128]{1,0:T(1,128)}', space=vmem, size = 0x12000, scoped, tag = 'internal scratch']
  %s0 = inlined_call_operand.hbm [shape: f32[8,1024], index: 0, kind: input, shape index: {}]
  %s1 = inlined_call_operand.vmem [shape: f32[8,4], index: 1, kind: input, shape index: {}]
  %s2 = inlined_call_operand.vmem [shape: f32[8,1], index: 2, kind: input, shape index: {}]
  %s3 = inlined_call_operand.vmem [shape: f32[16,8], index: 3, kind: input, shape index: {}]
  %s4 = inlined_call_operand.hbm [shape: f32[16,1024], index: 4, kind: output, shape index: {}]
  %s5 = sld [smem:[#allocation0]]
  $region30: #{tpu_custom_call.1} parent=0
    _
  %s7 = ssub.s32 1, %s5
  %s8 = scalar_select 0, %s7, %s5
  $region1: #{tpu_custom_call.1} parent=0
    #allocation2 [shape = 'u8[32768]{0}', space=vmem, size = 0x8000, scoped, tag = 'input window, operand 0, single buffered']
    #allocation3 [shape = 's32[1]{0}', space=sflag, size = 0x4, scoped, tag = 'scoped memory for tpu_custom_call.1']
    #allocation4 [shape = 's32[1]{0}', space=sflag, size = 0x4, scoped, tag = 'scoped memory for tpu_custom_call.1']
    #allocation5 [shape = 'u8[65536]{0}', space=vmem, size = 0x10000, scoped, tag = 'output window, operand 0, single buffered']
    %9 = vsyncpa [#allocation3], 0
    %10 = vsyncpa [#allocation4], 0
    // Predicated region
    $region2: #{tpu_custom_call.1} parent=1 // pred_check
      _
    $region3: #{tpu_custom_call.1} parent=1 // pred_check_branch
      %12 = sbr.rel (0) target = $region5
    $region4: #{tpu_custom_call.1} parent=1 // pred_region
      %s14 = ssub.s32 1024, 1024
      %15 = vsyncadd [#allocation3], %s14
      %s17 = sshll.u32 [#allocation2], 4
      %s18 = int_to_ptr.vmem [resolvable:$true] %s17
      %20 = dma.hbm_to_vmem [thread:$0]  %s0, 1024, %s18, [#allocation3]
    $region5: #{tpu_custom_call.1} parent=1 // pred_fallthru
      _
    // Predicated region
    $region6: #{tpu_custom_call.1} parent=1 // pred_check
      _
    $region7: #{tpu_custom_call.1} parent=1 // pred_check_branch
      %22 = sbr.rel (0) target = $region9
    $region8: #{tpu_custom_call.1} parent=1 // pred_region
      _
    $region9: #{tpu_custom_call.1} parent=1 // pred_fallthru
      _
    // Predicated region
    $region10: #{tpu_custom_call.1} parent=1 // pred_check
      _
    $region11: #{tpu_custom_call.1} parent=1 // pred_check_branch
      %24 = sbr.rel (0) target = $region13
    $region12: #{tpu_custom_call.1} parent=1 // pred_region
      _
    $region13: #{tpu_custom_call.1} parent=1 // pred_fallthru
      _
    // Predicated region
    $region14: #{tpu_custom_call.1} parent=1 // pred_check
      _
    $region15: #{tpu_custom_call.1} parent=1 // pred_check_branch
      %26 = sbr.rel (0) target = $region17
    $region16: #{tpu_custom_call.1} parent=1 // pred_region
      _
    $region17: #{tpu_custom_call.1} parent=1 // pred_fallthru
      _
    // Predicated region
    $region18: #{tpu_custom_call.1} parent=1 // pred_check
      _
    $region19: #{tpu_custom_call.1} parent=1 // pred_check_branch
      %28 = sbr.rel (0) target = $region21
    $region20: #{tpu_custom_call.1} parent=1 // pred_region
      %29 = dma.done [#allocation3], 1024
    $region21: #{tpu_custom_call.1} parent=1 // pred_fallthru
      _
    %v30 = vld [vmem:[#allocation2] sm:$0xff]
    %v31 = vld [vmem:[#allocation2 + $0x8] sm:$0xff]
    %v32 = vld [vmem:[#allocation2 + $0x10] sm:$0xff]
    %v33 = vld [vmem:[#allocation2 + $0x18] sm:$0xff]
    %v34 = vld [vmem:[#allocation2 + $0x20] sm:$0xff]
    %v35 = vld [vmem:[#allocation2 + $0x28] sm:$0xff]
    %v36 = vld [vmem:[#allocation2 + $0x30] sm:$0xff]
    %v37 = vld [vmem:[#allocation2 + $0x38] sm:$0xff]
    %v38 = vxor.u32 %v30, 2147483648
    %v39 = vxor.u32 %v31, 2147483648
    %v40 = vxor.u32 %v32, 2147483648
    %v41 = vxor.u32 %v33, 2147483648
    %v42 = vxor.u32 %v34, 2147483648
    %v43 = vxor.u32 %v35, 2147483648
    %v44 = vxor.u32 %v36, 2147483648
    %v45 = vxor.u32 %v37, 2147483648
    %v46 = vmul.f32 %v38, 1.442695
    %v47 = vpow.pop %v46
    %v48 = vmul.f32 %v39, 1.442695
    %v49 = vpow.pop %v48
    %v50 = vmul.f32 %v40, 1.442695
    %v51 = vpow.pop %v50
    %v52 = vmul.f32 %v41, 1.442695
    %v53 = vpow.pop %v52
    %v54 = vmul.f32 %v42, 1.442695
    %v55 = vpow.pop %v54
    %v56 = vmul.f32 %v43, 1.442695
    %v57 = vpow.pop %v56
    %v58 = vmul.f32 %v44, 1.442695
    %v59 = vpow.pop %v58
    %v60 = vmul.f32 %v45, 1.442695
    %v61 = vpow.pop %v60
    %v62 = vadd.f32 %v47, 1.0
    %v63 = vadd.f32 %v49, 1.0
    %v64 = vadd.f32 %v51, 1.0
    %v65 = vadd.f32 %v53, 1.0
    %v66 = vadd.f32 %v55, 1.0
    %v67 = vadd.f32 %v57, 1.0
    %v68 = vadd.f32 %v59, 1.0
    %v69 = vadd.f32 %v61, 1.0
    %v70 = vrcp.pop %v62
    %v71 = vmul.f32 1.0, %v70
    %v72 = vrcp.pop %v63
    %v73 = vmul.f32 1.0, %v72
    %v74 = vrcp.pop %v64
    %v75 = vmul.f32 1.0, %v74
    %v76 = vrcp.pop %v65
    %v77 = vmul.f32 1.0, %v76
    %v78 = vrcp.pop %v66
    %v79 = vmul.f32 1.0, %v78
    %v80 = vrcp.pop %v67
    %v81 = vmul.f32 1.0, %v80
    %v82 = vrcp.pop %v68
    %v83 = vmul.f32 1.0, %v82
    %v84 = vrcp.pop %v69
    %v85 = vmul.f32 1.0, %v84
    %v86 = vld [vmem:[%s1] sm:$0xff]
    %88 = vset.pattern.permute.xlu0 0
    %89 = vperm.xlu0 %88, %v86
    %v90 = vpop.permute.xlu0 %89
    %v92 = vmul.f32 %v90, %v71
    %v93 = vmul.f32 %v90, %v73
    %v94 = vmul.f32 %v90, %v75
    %v95 = vmul.f32 %v90, %v77
    %v96 = vmul.f32 %v90, %v79
    %v97 = vmul.f32 %v90, %v81
    %v98 = vmul.f32 %v90, %v83
    %v99 = vmul.f32 %v90, %v85
    %100 = vrot.lane.b32.xlu0 %v71, 127
    %v101 = vpop.permute.xlu0 %100
    %102 = vrot.lane.b32.xlu0 %v73, 127
    %v103 = vpop.permute.xlu0 %102
    %104 = vrot.lane.b32.xlu0 %v75, 127
    %v105 = vpop.permute.xlu0 %104
    %106 = vrot.lane.b32.xlu0 %v77, 127
    %v107 = vpop.permute.xlu0 %106
    %108 = vrot.lane.b32.xlu0 %v79, 127
    %v109 = vpop.permute.xlu0 %108
    %110 = vrot.lane.b32.xlu0 %v81, 127
    %v111 = vpop.permute.xlu0 %110
    %112 = vrot.lane.b32.xlu0 %v83, 127
    %v113 = vpop.permute.xlu0 %112
    %114 = vrot.lane.b32.xlu0 %v85, 127
    %v115 = vpop.permute.xlu0 %114
    %v116 = vlaneseq
    %v117 = vand.u32 %v116, 127
    %vm118 = vcmp.lt.s32.totalorder %v117, 127
    %v119 = vsel %vm118, %v113, %v115
    %v120 = vsel %vm118, %v111, %v113
    %v121 = vsel %vm118, %v109, %v111
    %v122 = vsel %vm118, %v107, %v109
    %v123 = vsel %vm118, %v105, %v107
    %v124 = vsel %vm118, %v103, %v105
    %v125 = vsel %vm118, %v101, %v103
    %v126 = vsel %vm118, %v115, %v101
    %127 = vset.pattern.permute.xlu0 1
    %128 = vperm.xlu0 %127, %v86
    %v129 = vpop.permute.xlu0 %128
    %v131 = vmul.f32 %v129, %v125
    %v132 = vmul.f32 %v129, %v124
    %v133 = vmul.f32 %v129, %v123
    %v134 = vmul.f32 %v129, %v122
    %v135 = vmul.f32 %v129, %v121
    %v136 = vmul.f32 %v129, %v120
    %v137 = vmul.f32 %v129, %v119
    %v138 = vmul.f32 %v129, %v126
    %v139 = vadd.f32 %v92, %v131
    %v140 = vadd.f32 %v93, %v132
    %v141 = vadd.f32 %v94, %v133
    %v142 = vadd.f32 %v95, %v134
    %v143 = vadd.f32 %v96, %v135
    %v144 = vadd.f32 %v97, %v136
    %v145 = vadd.f32 %v98, %v137
    %v146 = vadd.f32 %v99, %v138
    %147 = vrot.lane.b32.xlu0 %v71, 126
    %v148 = vpop.permute.xlu0 %147
    %149 = vrot.lane.b32.xlu0 %v73, 126
    %v150 = vpop.permute.xlu0 %149
    %151 = vrot.lane.b32.xlu0 %v75, 126
    %v152 = vpop.permute.xlu0 %151
    %153 = vrot.lane.b32.xlu0 %v77, 126
    %v154 = vpop.permute.xlu0 %153
    %155 = vrot.lane.b32.xlu0 %v79, 126
    %v156 = vpop.permute.xlu0 %155
    %157 = vrot.lane.b32.xlu0 %v81, 126
    %v158 = vpop.permute.xlu0 %157
    %159 = vrot.lane.b32.xlu0 %v83, 126
    %v160 = vpop.permute.xlu0 %159
    %161 = vrot.lane.b32.xlu0 %v85, 126
    %v162 = vpop.permute.xlu0 %161
    %vm163 = vcmp.lt.s32.totalorder %v117, 126
    %v164 = vsel %vm163, %v160, %v162
    %v165 = vsel %vm163, %v158, %v160
    %v166 = vsel %vm163, %v156, %v158
    %v167 = vsel %vm163, %v154, %v156
    %v168 = vsel %vm163, %v152, %v154
    %v169 = vsel %vm163, %v150, %v152
    %v170 = vsel %vm163, %v148, %v150
    %v171 = vsel %vm163, %v162, %v148
    %172 = vset.pattern.permute.xlu0 2
    %173 = vperm.xlu0 %172, %v86
    %v174 = vpop.permute.xlu0 %173
    %v176 = vmul.f32 %v174, %v170
    %v177 = vmul.f32 %v174, %v169
    %v178 = vmul.f32 %v174, %v168
    %v179 = vmul.f32 %v174, %v167
    %v180 = vmul.f32 %v174, %v166
    %v181 = vmul.f32 %v174, %v165
    %v182 = vmul.f32 %v174, %v164
    %v183 = vmul.f32 %v174, %v171
    %v184 = vadd.f32 %v139, %v176
    %v185 = vadd.f32 %v140, %v177
    %v186 = vadd.f32 %v141, %v178
    %v187 = vadd.f32 %v142, %v179
    %v188 = vadd.f32 %v143, %v180
    %v189 = vadd.f32 %v144, %v181
    %v190 = vadd.f32 %v145, %v182
    %v191 = vadd.f32 %v146, %v183
    %192 = vrot.lane.b32.xlu0 %v71, 125
    %v193 = vpop.permute.xlu0 %192
    %194 = vrot.lane.b32.xlu0 %v73, 125
    %v195 = vpop.permute.xlu0 %194
    %196 = vrot.lane.b32.xlu0 %v75, 125
    %v197 = vpop.permute.xlu0 %196
    %198 = vrot.lane.b32.xlu0 %v77, 125
    %v199 = vpop.permute.xlu0 %198
    %200 = vrot.lane.b32.xlu0 %v79, 125
    %v201 = vpop.permute.xlu0 %200
    %202 = vrot.lane.b32.xlu0 %v81, 125
    %v203 = vpop.permute.xlu0 %202
    %204 = vrot.lane.b32.xlu0 %v83, 125
    %v205 = vpop.permute.xlu0 %204
    %206 = vrot.lane.b32.xlu0 %v85, 125
    %v207 = vpop.permute.xlu0 %206
    %vm208 = vcmp.lt.s32.totalorder %v117, 125
    %v209 = vsel %vm208, %v205, %v207
    %v210 = vsel %vm208, %v203, %v205
    %v211 = vsel %vm208, %v201, %v203
    %v212 = vsel %vm208, %v199, %v201
    %v213 = vsel %vm208, %v197, %v199
    %v214 = vsel %vm208, %v195, %v197
    %v215 = vsel %vm208, %v193, %v195
    %v216 = vsel %vm208, %v207, %v193
    %217 = vset.pattern.permute.xlu0 3
    %218 = vperm.xlu0 %217, %v86
    %v219 = vpop.permute.xlu0 %218
    %v221 = vmul.f32 %v219, %v215
    %v222 = vmul.f32 %v219, %v214
    %v223 = vmul.f32 %v219, %v213
    %v224 = vmul.f32 %v219, %v212
    %v225 = vmul.f32 %v219, %v211
    %v226 = vmul.f32 %v219, %v210
    %v227 = vmul.f32 %v219, %v209
    %v228 = vmul.f32 %v219, %v216
    %v229 = vadd.f32 %v184, %v221
    %v230 = vadd.f32 %v185, %v222
    %v231 = vadd.f32 %v186, %v223
    %v232 = vadd.f32 %v187, %v224
    %v233 = vadd.f32 %v188, %v225
    %v234 = vadd.f32 %v189, %v226
    %v235 = vadd.f32 %v190, %v227
    %v236 = vadd.f32 %v191, %v228
    %v237 = vld [vmem:[%s2] sm:$0xff]
    %239 = vset.pattern.permute.xlu0 0
    %240 = vperm.xlu0 %239, %v237
    %v241 = vpop.permute.xlu0 %240
    %v243 = vadd.f32 %v229, %v241
    %v244 = vadd.f32 %v230, %v241
    %v245 = vadd.f32 %v231, %v241
    %v246 = vadd.f32 %v232, %v241
    %v247 = vadd.f32 %v233, %v241
    %v248 = vadd.f32 %v234, %v241
    %v249 = vadd.f32 %v235, %v241
    %v250 = vadd.f32 %v236, %v241
    %v251 = vld [vmem:[%s3] sm:$0xff]
    %v252 = vld [vmem:[%s3 + $0x8] sm:$0xff]
    %vm253 = vcmask 64512
    %v255 = vsel %vm253, %v251, 0
    %v258 = vsel %vm253, %v252, 0
    %260 = vmatprep.subr.mxu0 %v244
    %261 = vmatpush1.msra.mxu0 %v243
    %262 = vmatprep.subr.mxu0 0.0
    %263 = vmatpush1.msra.mxu0 0.0
    %264 = vmatprep.subr.mxu0 0.0
    %265 = vmatpush1.msra.mxu0 0.0
    %266 = vmatprep.subr.mxu0 0.0
    %267 = vmatpush1.msra.mxu0 0.0
    %268 = vmatprep.subr.mxu0 0.0
    %269 = vmatpush1.msra.mxu0 0.0
    %270 = vmatprep.subr.mxu0 0.0
    %271 = vmatpush1.msra.mxu0 0.0
    %272 = vmatprep.subr.mxu0 0.0
    %273 = vmatpush1.msra.mxu0 0.0
    %274 = vmatprep.subr.mxu0 0.0
    %275 = vmatpush1.msra.mxu0 0.0
    %276 = vmatprep.subr.mxu0 0.0
    %277 = vmatpush1.msra.mxu0 0.0
    %278 = vmatprep.subr.mxu0 0.0
    %279 = vmatpush1.msra.mxu0 0.0
    %280 = vmatprep.subr.mxu0 0.0
    %281 = vmatpush1.msra.mxu0 0.0
    %282 = vmatprep.subr.mxu0 0.0
    %283 = vmatpush1.msra.mxu0 0.0
    %284 = vmatprep.subr.mxu0 0.0
    %285 = vmatpush1.msra.mxu0 0.0
    %286 = vmatprep.subr.mxu0 0.0
    %287 = vmatpush1.msra.mxu0 0.0
    %288 = vmatprep.subr.mxu0 0.0
    %289 = vmatpush1.msra.mxu0 0.0
    %290 = vmatprep.subr.mxu0 0.0
    %291 = vmatpush1.msra.mxu0 0.0
    %292 = vmatprep.subr.mxu0 0.0
    %293 = vmatpush1.msra.mxu0 0.0
    %294 = vmatprep.subr.mxu0 0.0
    %295 = vmatpush1.msra.mxu0 0.0
    %296 = vmatprep.subr.mxu0 0.0
    %297 = vmatpush1.msra.mxu0 0.0
    %298 = vmatprep.subr.mxu0 0.0
    %299 = vmatpush1.msra.mxu0 0.0
    %300 = vmatprep.subr.mxu0 0.0
    %301 = vmatpush1.msra.mxu0 0.0
    %302 = vmatprep.subr.mxu0 0.0
    %303 = vmatpush1.msra.mxu0 0.0
    %304 = vmatprep.subr.mxu0 0.0
    %305 = vmatpush1.msra.mxu0 0.0
    %306 = vmatprep.subr.mxu0 0.0
    %307 = vmatpush1.msra.mxu0 0.0
    %308 = vmatprep.subr.mxu0 0.0
    %309 = vmatpush1.msra.mxu0 0.0
    %310 = vmatprep.subr.mxu0 0.0
    %311 = vmatpush1.msra.mxu0 0.0
    %312 = vmatprep.subr.mxu0 0.0
    %313 = vmatpush1.msra.mxu0 0.0
    %314 = vmatprep.subr.mxu0 0.0
    %315 = vmatpush1.msra.mxu0 0.0
    %316 = vmatprep.subr.mxu0 0.0
    %317 = vmatpush1.msra.mxu0 0.0
    %318 = vmatprep.subr.mxu0 0.0
    %319 = vmatpush1.msra.mxu0 0.0
    %320 = vmatprep.subr.mxu0 0.0
    %321 = vmatpush1.msra.mxu0 0.0
    %322 = vmatprep.subr.mxu0 0.0
    %323 = vmatpush1.msra.mxu0 0.0
    %324 = vmatprep.mubr.f32.mxu0 0.0
    %325 = vmatmul.mubr.f32.gmra.mrb[0].mxu0 %v255
    %v326 = vpop.f32.mrb[0].mxu0
    %v327 = vadd.f32 0.0, %v326
    %v328 = vpop.f32.mrb[0].mxu0
    %v329 = vadd.f32 0.0, %v328
    %330 = vmatprep.mubr.f32.mxu0 0.0
    %331 = vmatmul.mubr.f32.gmra.mrb[0].mxu0 %v258
    %v332 = vpop.f32.mrb[0].mxu0
    %v333 = vadd.f32 0.0, %v332
    %v334 = vpop.f32.mrb[0].mxu0
    %v335 = vadd.f32 0.0, %v334
    %336 = vdwg.mxu0
    %337 = vmatprep.subr.mxu0 %v246
    %338 = vmatpush1.msra.mxu0 %v245
    %339 = vmatprep.subr.mxu0 0.0
    %340 = vmatpush1.msra.mxu0 0.0
    %341 = vmatprep.subr.mxu0 0.0
    %342 = vmatpush1.msra.mxu0 0.0
    %343 = vmatprep.subr.mxu0 0.0
    %344 = vmatpush1.msra.mxu0 0.0
    %345 = vmatprep.subr.mxu0 0.0
    %346 = vmatpush1.msra.mxu0 0.0
    %347 = vmatprep.subr.mxu0 0.0
    %348 = vmatpush1.msra.mxu0 0.0
    %349 = vmatprep.subr.mxu0 0.0
    %350 = vmatpush1.msra.mxu0 0.0
    %351 = vmatprep.subr.mxu0 0.0
    %352 = vmatpush1.msra.mxu0 0.0
    %353 = vmatprep.subr.mxu0 0.0
    %354 = vmatpush1.msra.mxu0 0.0
    %355 = vmatprep.subr.mxu0 0.0
    %356 = vmatpush1.msra.mxu0 0.0
    %357 = vmatprep.subr.mxu0 0.0
    %358 = vmatpush1.msra.mxu0 0.0
    %359 = vmatprep.subr.mxu0 0.0
    %360 = vmatpush1.msra.mxu0 0.0
    %361 = vmatprep.subr.mxu0 0.0
    %362 = vmatpush1.msra.mxu0 0.0
    %363 = vmatprep.subr.mxu0 0.0
    %364 = vmatpush1.msra.mxu0 0.0
    %365 = vmatprep.subr.mxu0 0.0
    %366 = vmatpush1.msra.mxu0 0.0
    %367 = vmatprep.subr.mxu0 0.0
    %368 = vmatpush1.msra.mxu0 0.0
    %369 = vmatprep.subr.mxu0 0.0
    %370 = vmatpush1.msra.mxu0 0.0
    %371 = vmatprep.subr.mxu0 0.0
    %372 = vmatpush1.msra.mxu0 0.0
    %373 = vmatprep.subr.mxu0 0.0
    %374 = vmatpush1.msra.mxu0 0.0
    %375 = vmatprep.subr.mxu0 0.0
    %376 = vmatpush1.msra.mxu0 0.0
    %377 = vmatprep.subr.mxu0 0.0
    %378 = vmatpush1.msra.mxu0 0.0
    %379 = vmatprep.subr.mxu0 0.0
    %380 = vmatpush1.msra.mxu0 0.0
    %381 = vmatprep.subr.mxu0 0.0
    %382 = vmatpush1.msra.mxu0 0.0
    %383 = vmatprep.subr.mxu0 0.0
    %384 = vmatpush1.msra.mxu0 0.0
    %385 = vmatprep.subr.mxu0 0.0
    %386 = vmatpush1.msra.mxu0 0.0
    %387 = vmatprep.subr.mxu0 0.0
    %388 = vmatpush1.msra.mxu0 0.0
    %389 = vmatprep.subr.mxu0 0.0
    %390 = vmatpush1.msra.mxu0 0.0
    %391 = vmatprep.subr.mxu0 0.0
    %392 = vmatpush1.msra.mxu0 0.0
    %393 = vmatprep.subr.mxu0 0.0
    %394 = vmatpush1.msra.mxu0 0.0
    %395 = vmatprep.subr.mxu0 0.0
    %396 = vmatpush1.msra.mxu0 0.0
    %397 = vmatprep.subr.mxu0 0.0
    %398 = vmatpush1.msra.mxu0 0.0
    %399 = vmatprep.subr.mxu0 0.0
    %400 = vmatpush1.msra.mxu0 0.0
    %401 = vmatprep.mubr.f32.mxu0 0.0
    %402 = vmatmul.mubr.f32.gmra.mrb[0].mxu0 %v255
    %v403 = vpop.f32.mrb[0].mxu0
    %v404 = vadd.f32 0.0, %v403
    %v405 = vpop.f32.mrb[0].mxu0
    %v406 = vadd.f32 0.0, %v405
    %407 = vmatprep.mubr.f32.mxu0 0.0
    %408 = vmatmul.mubr.f32.gmra.mrb[0].mxu0 %v258
    %v409 = vpop.f32.mrb[0].mxu0
    %v410 = vadd.f32 0.0, %v409
    %v411 = vpop.f32.mrb[0].mxu0
    %v412 = vadd.f32 0.0, %v411
    %413 = vdwg.mxu0
    %414 = vmatprep.subr.mxu0 %v248
    %415 = vmatpush1.msra.mxu0 %v247
    %416 = vmatprep.subr.mxu0 0.0
    %417 = vmatpush1.msra.mxu0 0.0
    %418 = vmatprep.subr.mxu0 0.0
    %419 = vmatpush1.msra.mxu0 0.0
    %420 = vmatprep.subr.mxu0 0.0
    %421 = vmatpush1.msra.mxu0 0.0
    %422 = vmatprep.subr.mxu0 0.0
    %423 = vmatpush1.msra.mxu0 0.0
    %424 = vmatprep.subr.mxu0 0.0
    %425 = vmatpush1.msra.mxu0 0.0
    %426 = vmatprep.subr.mxu0 0.0
    %427 = vmatpush1.msra.mxu0 0.0
    %428 = vmatprep.subr.mxu0 0.0
    %429 = vmatpush1.msra.mxu0 0.0
    %430 = vmatprep.subr.mxu0 0.0
    %431 = vmatpush1.msra.mxu0 0.0
    %432 = vmatprep.subr.mxu0 0.0
    %433 = vmatpush1.msra.mxu0 0.0
    %434 = vmatprep.subr.mxu0 0.0
    %435 = vmatpush1.msra.mxu0 0.0
    %436 = vmatprep.subr.mxu0 0.0
    %437 = vmatpush1.msra.mxu0 0.0
    %438 = vmatprep.subr.mxu0 0.0
    %439 = vmatpush1.msra.mxu0 0.0
    %440 = vmatprep.subr.mxu0 0.0
    %441 = vmatpush1.msra.mxu0 0.0
    %442 = vmatprep.subr.mxu0 0.0
    %443 = vmatpush1.msra.mxu0 0.0
    %444 = vmatprep.subr.mxu0 0.0
    %445 = vmatpush1.msra.mxu0 0.0
    %446 = vmatprep.subr.mxu0 0.0
    %447 = vmatpush1.msra.mxu0 0.0
    %448 = vmatprep.subr.mxu0 0.0
    %449 = vmatpush1.msra.mxu0 0.0
    %450 = vmatprep.subr.mxu0 0.0
    %451 = vmatpush1.msra.mxu0 0.0
    %452 = vmatprep.subr.mxu0 0.0
    %453 = vmatpush1.msra.mxu0 0.0
    %454 = vmatprep.subr.mxu0 0.0
    %455 = vmatpush1.msra.mxu0 0.0
    %456 = vmatprep.subr.mxu0 0.0
    %457 = vmatpush1.msra.mxu0 0.0
    %458 = vmatprep.subr.mxu0 0.0
    %459 = vmatpush1.msra.mxu0 0.0
    %460 = vmatprep.subr.mxu0 0.0
    %461 = vmatpush1.msra.mxu0 0.0
    %462 = vmatprep.subr.mxu0 0.0
    %463 = vmatpush1.msra.mxu0 0.0
    %464 = vmatprep.subr.mxu0 0.0
    %465 = vmatpush1.msra.mxu0 0.0
    %466 = vmatprep.subr.mxu0 0.0
    %467 = vmatpush1.msra.mxu0 0.0
    %468 = vmatprep.subr.mxu0 0.0
    %469 = vmatpush1.msra.mxu0 0.0
    %470 = vmatprep.subr.mxu0 0.0
    %471 = vmatpush1.msra.mxu0 0.0
    %472 = vmatprep.subr.mxu0 0.0
    %473 = vmatpush1.msra.mxu0 0.0
    %474 = vmatprep.subr.mxu0 0.0
    %475 = vmatpush1.msra.mxu0 0.0
    %476 = vmatprep.subr.mxu0 0.0
    %477 = vmatpush1.msra.mxu0 0.0
    %478 = vmatprep.mubr.f32.mxu0 0.0
    %479 = vmatmul.mubr.f32.gmra.mrb[0].mxu0 %v255
    %v480 = vpop.f32.mrb[0].mxu0
    %v481 = vadd.f32 0.0, %v480
    %v482 = vpop.f32.mrb[0].mxu0
    %v483 = vadd.f32 0.0, %v482
    %484 = vmatprep.mubr.f32.mxu0 0.0
    %485 = vmatmul.mubr.f32.gmra.mrb[0].mxu0 %v258
    %v486 = vpop.f32.mrb[0].mxu0
    %v487 = vadd.f32 0.0, %v486
    %v488 = vpop.f32.mrb[0].mxu0
    %v489 = vadd.f32 0.0, %v488
    %490 = vdwg.mxu0
    %491 = vmatprep.subr.mxu0 %v250
    %492 = vmatpush1.msra.mxu0 %v249
    %493 = vmatprep.subr.mxu0 0.0
    %494 = vmatpush1.msra.mxu0 0.0
    %495 = vmatprep.subr.mxu0 0.0
    %496 = vmatpush1.msra.mxu0 0.0
    %497 = vmatprep.subr.mxu0 0.0
    %498 = vmatpush1.msra.mxu0 0.0
    %499 = vmatprep.subr.mxu0 0.0
    %500 = vmatpush1.msra.mxu0 0.0
    %501 = vmatprep.subr.mxu0 0.0
    %502 = vmatpush1.msra.mxu0 0.0
    %503 = vmatprep.subr.mxu0 0.0
    %504 = vmatpush1.msra.mxu0 0.0
    %505 = vmatprep.subr.mxu0 0.0
    %506 = vmatpush1.msra.mxu0 0.0
    %507 = vmatprep.subr.mxu0 0.0
    %508 = vmatpush1.msra.mxu0 0.0
    %509 = vmatprep.subr.mxu0 0.0
    %510 = vmatpush1.msra.mxu0 0.0
    %511 = vmatprep.subr.mxu0 0.0
    %512 = vmatpush1.msra.mxu0 0.0
    %513 = vmatprep.subr.mxu0 0.0
    %514 = vmatpush1.msra.mxu0 0.0
    %515 = vmatprep.subr.mxu0 0.0
    %516 = vmatpush1.msra.mxu0 0.0
    %517 = vmatprep.subr.mxu0 0.0
    %518 = vmatpush1.msra.mxu0 0.0
    %519 = vmatprep.subr.mxu0 0.0
    %520 = vmatpush1.msra.mxu0 0.0
    %521 = vmatprep.subr.mxu0 0.0
    %522 = vmatpush1.msra.mxu0 0.0
    %523 = vmatprep.subr.mxu0 0.0
    %524 = vmatpush1.msra.mxu0 0.0
    %525 = vmatprep.subr.mxu0 0.0
    %526 = vmatpush1.msra.mxu0 0.0
    %527 = vmatprep.subr.mxu0 0.0
    %528 = vmatpush1.msra.mxu0 0.0
    %529 = vmatprep.subr.mxu0 0.0
    %530 = vmatpush1.msra.mxu0 0.0
    %531 = vmatprep.subr.mxu0 0.0
    %532 = vmatpush1.msra.mxu0 0.0
    %533 = vmatprep.subr.mxu0 0.0
    %534 = vmatpush1.msra.mxu0 0.0
    %535 = vmatprep.subr.mxu0 0.0
    %536 = vmatpush1.msra.mxu0 0.0
    %537 = vmatprep.subr.mxu0 0.0
    %538 = vmatpush1.msra.mxu0 0.0
    %539 = vmatprep.subr.mxu0 0.0
    %540 = vmatpush1.msra.mxu0 0.0
    %541 = vmatprep.subr.mxu0 0.0
    %542 = vmatpush1.msra.mxu0 0.0
    %543 = vmatprep.subr.mxu0 0.0
    %544 = vmatpush1.msra.mxu0 0.0
    %545 = vmatprep.subr.mxu0 0.0
    %546 = vmatpush1.msra.mxu0 0.0
    %547 = vmatprep.subr.mxu0 0.0
    %548 = vmatpush1.msra.mxu0 0.0
    %549 = vmatprep.subr.mxu0 0.0
    %550 = vmatpush1.msra.mxu0 0.0
    %551 = vmatprep.subr.mxu0 0.0
    %552 = vmatpush1.msra.mxu0 0.0
    %553 = vmatprep.subr.mxu0 0.0
    %554 = vmatpush1.msra.mxu0 0.0
    %555 = vmatprep.mubr.f32.mxu0 0.0
    %556 = vmatmul.mubr.f32.gmra.mrb[0].mxu0 %v255
    %v557 = vpop.f32.mrb[0].mxu0
    %v558 = vadd.f32 0.0, %v557
    %v559 = vpop.f32.mrb[0].mxu0
    %v560 = vadd.f32 0.0, %v559
    %561 = vmatprep.mubr.f32.mxu0 0.0
    %562 = vmatmul.mubr.f32.gmra.mrb[0].mxu0 %v258
    %v563 = vpop.f32.mrb[0].mxu0
    %v564 = vadd.f32 0.0, %v563
    %v565 = vpop.f32.mrb[0].mxu0
    %v566 = vadd.f32 0.0, %v565
    %567 = vdwg.mxu0
    %568 = vst [vmem:[#allocation5] sm:$0xff] %v327
    %569 = vst [vmem:[#allocation5 + $0x8] sm:$0xff] %v329
    %570 = vst [vmem:[#allocation5 + $0x10] sm:$0xff] %v404
    %571 = vst [vmem:[#allocation5 + $0x18] sm:$0xff] %v406
    %572 = vst [vmem:[#allocation5 + $0x20] sm:$0xff] %v481
    %573 = vst [vmem:[#allocation5 + $0x28] sm:$0xff] %v483
    %574 = vst [vmem:[#allocation5 + $0x30] sm:$0xff] %v558
    %575 = vst [vmem:[#allocation5 + $0x38] sm:$0xff] %v560
    %576 = vst [vmem:[#allocation5 + $0x40] sm:$0xff] %v333
    %577 = vst [vmem:[#allocation5 + $0x48] sm:$0xff] %v335
    %578 = vst [vmem:[#allocation5 + $0x50] sm:$0xff] %v410
    %579 = vst [vmem:[#allocation5 + $0x58] sm:$0xff] %v412
    %580 = vst [vmem:[#allocation5 + $0x60] sm:$0xff] %v487
    %581 = vst [vmem:[#allocation5 + $0x68] sm:$0xff] %v489
    %582 = vst [vmem:[#allocation5 + $0x70] sm:$0xff] %v564
    %583 = vst [vmem:[#allocation5 + $0x78] sm:$0xff] %v566
    // Predicated region
    $region22: #{tpu_custom_call.1} parent=1 // pred_check
      _
    $region23: #{tpu_custom_call.1} parent=1 // pred_check_branch
      %585 = sbr.rel (0) target = $region25
    $region24: #{tpu_custom_call.1} parent=1 // pred_region
      %s587 = ssub.s32 2048, 2048
      %588 = vsyncadd [#allocation4], %s587
      %s589 = sshll.u32 [#allocation5], 4
      %s590 = int_to_ptr.vmem [resolvable:$true] %s589
      %595 = dma.vmem_to_hbm [thread:$0]  %s590, 2048, %s4, [#allocation4], 1024, 1024, 64
    $region25: #{tpu_custom_call.1} parent=1 // pred_fallthru
      _
    // Predicated region
    $region26: #{tpu_custom_call.1} parent=1 // pred_check
      _
    $region27: #{tpu_custom_call.1} parent=1 // pred_check_branch
      %597 = sbr.rel (0) target = $region29
    $region28: #{tpu_custom_call.1} parent=1 // pred_region
      %598 = dma.done [#allocation4], 2048
    $region29: #{tpu_custom_call.1} parent=1 // pred_fallthru
      _
    %599 = vsyncpa [#allocation3], 1
    %600 = vsyncpa [#allocation4], 1

</llo_original>
